<compile_context>
chip_gen: v6e
topology: v6e:2x2x1
jax: 0.10.0
libtpu: 0.0.40
codegen_flags: <defaults>
</compile_context>

<pallas_src>
import functools

import jax
import jax.numpy as jnp
from jax.experimental import pallas as pl
from jax.experimental.pallas import tpu as pltpu


# ---------------------------------------------------------------------------
# Kernel
# ---------------------------------------------------------------------------
def _dice_ce_kernel(logits_ref, tgt_ref,
                    ce_out, inter_out, psum_out,
                    ce_acc, inter_acc, psum_acc,
                    *, hw, tiles_per_part, tile_p):
    g = pl.program_id(0)          # partial-sum slice
    n = pl.program_id(1)          # batch image
    i = pl.program_id(2)          # pixel tile within the partial slice

    @pl.when((n == 0) & (i == 0))
    def _():
        ce_acc[...] = jnp.zeros_like(ce_acc)
        inter_acc[...] = jnp.zeros_like(inter_acc)
        psum_acc[...] = jnp.zeros_like(psum_acc)

    x = logits_ref[...].astype(jnp.float32)       # (C, TP)
    t = tgt_ref[...].astype(jnp.int32)            # (1, TP)
    C, TP = x.shape

    # Lane-validity mask: covers the ragged tail of H*W and any fully
    # out-of-range tile of the last partial slice (its DMA index is clamped
    # in the index_map; its contribution is zeroed here).
    pix0 = (g * tiles_per_part + i) * tile_p
    lane = jax.lax.broadcasted_iota(jnp.int32, (1, TP), 1)
    valid = (pix0 + lane) < hw                    # (1, TP) bool
    maskf = valid.astype(jnp.float32)

    x = jnp.where(valid, x, 0.0)                  # keep padded garbage finite

    # Tiny (C, 1) iota; the compare below broadcasts to (C, TP).
    class_ids = jax.lax.broadcasted_iota(jnp.int32, (C, 1), 0)
    is_tgt = class_ids == t                       # (C, TP) bool
    # TODO(synk): out-of-range / ignore-index labels (e.g. 255) are assumed
    # absent; labels must lie in [0, C).

    # Numerically stable softmax / log-sum-exp over the class (sublane) axis.
    m = jnp.max(x, axis=0, keepdims=True)         # (1, TP)
    e = jnp.exp(x - m)                            # (C, TP)
    s = jnp.sum(e, axis=0, keepdims=True)         # (1, TP)
    inv_s = pl.reciprocal(s) * maskf              # masked once -> probs masked
    lse = m + jnp.log(s)                          # (1, TP)
    probs = e * inv_s                             # (C, TP), 0 on invalid lanes

    # Cross-entropy: lse - logit[target], masked on the lane axis.
    tgt_logit = jnp.sum(jnp.where(is_tgt, x, 0.0), axis=0, keepdims=True)
    ce_acc[...] += (lse - tgt_logit) * maskf

    # Dice numerator / probability sums (lane-dense VPU adds only).
    inter_acc[...] += jnp.where(is_tgt, probs, 0.0)
    psum_acc[...] += probs

    # Finalize this partial slice: one cross-lane reduction per accumulator.
    @pl.when((n == pl.num_programs(1) - 1) & (i == pl.num_programs(2) - 1))
    def _():
        ce_out[...] = jnp.sum(ce_acc[...], keepdims=True)                # (1,1)
        inter_out[...] = jnp.sum(inter_acc[...], axis=1, keepdims=True)  # (C,1)
        psum_out[...] = jnp.sum(psum_acc[...], axis=1, keepdims=True)    # (C,1)


# ---------------------------------------------------------------------------
# Tiling helpers
# ---------------------------------------------------------------------------
def _vmem_capacity_bytes():
    """Physical VMEM per TensorCore; conservative fallback if unqueryable."""
    try:
        info = pltpu.get_tpu_info()
        cap = int(getattr(info, "vmem_capacity_bytes", 0) or 0)
        if cap > 0:
            return cap
    except Exception:
        pass
    return 64 * 1024 * 1024      # v7x per-TC size; safe lower bound everywhere


def _pick_tile_p(hw, c, logit_bytes, budget, requested):
    """Largest multiple-of-128 pixel tile fitting the VMEM budget."""
    c_pad = ((c + 7) // 8) * 8   # sublane padding for (C, tile_p) arrays
    per_lane = (2 * c_pad * max(int(logit_bytes), 2)  # double-buffered logits
                + 2 * 8 * 4                           # double-buffered i32 targets
                + 8 * 4                               # ce accumulator (1 row, padded)
                + 2 * c_pad * 4)                      # inter / psum f32 accumulators
    cap = max(128, (budget // per_lane) // 128 * 128)
    tile_p = int(min(requested, cap))
    if hw <= tile_p:
        return int(hw)           # full pixel dim is a legal block extent
    return tile_p                # multiple of 128; ragged tail is masked


# ---------------------------------------------------------------------------
# Wrapper
# ---------------------------------------------------------------------------
def dice_cross_entropy_loss(logits, targets, *, ce_weight=1.0, dice_weight=1.0,
                            dice_smooth=1e-6, tile_p=32768, num_partials=1):
    """logits: (N, C, H, W) float (f32 or bf16); targets: (N, H, W) int labels."""
    # TODO(synk): the PyTorch branch for soft/dense (N, C, H, W) float targets
    # is not implemented; only hard integer labels are supported.
    N, C, H, W = logits.shape
    HW = H * W
    P = N * HW

    vmem_cap = _vmem_capacity_bytes()
    budget = int(min(24 * 1024 * 1024, max(8 * 1024 * 1024, vmem_cap // 4)))
    vmem_limit = int(min(96 * 1024 * 1024, (vmem_cap * 3) // 4))

    tile_p = _pick_tile_p(HW, C, jnp.dtype(logits.dtype).itemsize, budget, tile_p)
    n_tiles = pl.cdiv(HW, tile_p)
    G = max(1, min(num_partials, n_tiles))        # partial-sum slices
    tiles_per_part = pl.cdiv(n_tiles, G)

    # Free views of the natural layouts — no HBM transpose/copy of the logits.
    x = logits.reshape(N, C, HW)
    t = targets.reshape(N, 1, HW)
    if not jnp.issubdtype(t.dtype, jnp.integer):
        t = t.astype(jnp.int32)

    def pix_index(g, n, i):
        # Clamp fully out-of-range tiles of the last partial slice; their
        # contribution is masked to zero inside the kernel.
        return (n, 0, jnp.minimum(g * tiles_per_part + i, n_tiles - 1))

    kernel = functools.partial(
        _dice_ce_kernel, hw=HW, tiles_per_part=tiles_per_part, tile_p=tile_p)

    ce_p, inter_p, psum_p = pl.pallas_call(
        kernel,
        out_shape=(
            jax.ShapeDtypeStruct((G, 1, 1), jnp.float32),
            jax.ShapeDtypeStruct((G, C, 1), jnp.float32),
            jax.ShapeDtypeStruct((G, C, 1), jnp.float32),
        ),
        grid_spec=pltpu.PrefetchScalarGridSpec(
            num_scalar_prefetch=0,
            grid=(G, N, tiles_per_part),
            in_specs=[
                pl.BlockSpec((None, C, tile_p), pix_index),
                pl.BlockSpec((None, 1, tile_p), pix_index),
            ],
            out_specs=(
                pl.BlockSpec((None, 1, 1), lambda g, n, i: (g, 0, 0)),
                pl.BlockSpec((None, C, 1), lambda g, n, i: (g, 0, 0)),
                pl.BlockSpec((None, C, 1), lambda g, n, i: (g, 0, 0)),
            ),
            scratch_shapes=[
                pltpu.VMEM((1, tile_p), jnp.float32),   # ce_acc
                pltpu.VMEM((C, tile_p), jnp.float32),   # inter_acc
                pltpu.VMEM((C, tile_p), jnp.float32),   # psum_acc
            ],
        ),
        compiler_params=pltpu.CompilerParams(
            dimension_semantics=("parallel", "arbitrary", "arbitrary"),
            vmem_limit_bytes=vmem_limit),
    )(x, t)

    # Per-class target pixel count (tsum) from the int targets only; this is
    # the per-class histogram and avoids a (C, tile_p) accumulator + per-step
    # VPU add in the kernel. mode="drop" matches one_hot for labels >= C.
    tflat = targets.reshape(-1).astype(jnp.int32)
    tsum = jnp.zeros((C,), jnp.float32).at[tflat].add(1.0, mode="drop")

    # Tiny per-partial combine + final scalar math (a few flops) in JAX.
    ce_mean = jnp.sum(ce_p) / P
    inter = jnp.sum(inter_p, axis=(0, 2))         # (C,)
    psum = jnp.sum(psum_p, axis=(0, 2))           # (C,)
    dice_c = (2.0 * inter + dice_smooth) / (psum + tsum + dice_smooth)
    dice_loss = jnp.mean(1.0 - dice_c)
    return ce_weight * ce_mean + dice_weight * dice_loss


# ---------------------------------------------------------------------------
# Pure-JAX reference mirroring the PyTorch forward
# ---------------------------------------------------------------------------
def _reference_loss(logits, targets, ce_weight=1.0, dice_weight=1.0,
                    dice_smooth=1e-6):
    C = logits.shape[1]
    logits = logits.astype(jnp.float32)
    logp = jax.nn.log_softmax(logits, axis=1)
    onehot = jnp.transpose(jax.nn.one_hot(targets, C, dtype=jnp.float32),
                           (0, 3, 1, 2))
    ce = -jnp.mean(jnp.sum(onehot * logp, axis=1))
    probs = jax.nn.softmax(logits, axis=1)
    inter = jnp.sum(probs * onehot, axis=(0, 2, 3))
    dice_c = (2.0 * inter + dice_smooth) / (
        jnp.sum(probs, axis=(0, 2, 3)) + jnp.sum(onehot, axis=(0, 2, 3))
        + dice_smooth)
    dice_loss = jnp.mean(1.0 - dice_c)
    return ce_weight * ce + dice_weight * dice_loss


if __name__ == "__main__":
    key = jax.random.PRNGKey(0)
    k_logits, k_targets = jax.random.split(key)

    N, C, H, W = 2, 4, 16, 16
    logits = jax.random.normal(k_logits, (N, C, H, W), dtype=jnp.float32)
    targets = jax.random.randint(k_targets, (N, H, W), 0, C, dtype=jnp.int32)

    loss = dice_cross_entropy_loss(logits, targets)
    loss = jax.block_until_ready(loss)

    ref = jax.block_until_ready(_reference_loss(logits, targets))
    assert jnp.allclose(loss, ref, atol=1e-5, rtol=1e-5), (loss, ref)

    print("KERNEL_OK")
</pallas_src>

<mosaic_0001>
module attributes {stable_mosaic.version = 11 : i64} {
  func.func @_dice_ce_kernel(%arg0: i32, %arg1: i32, %arg2: i32, %arg3: memref<1x4x256xf32, #tpu.memory_space<vmem>>, %arg4: memref<1x1x256xi32, #tpu.memory_space<vmem>>, %arg5: memref<1x1x1xf32, #tpu.memory_space<vmem>>, %arg6: memref<1x4x1xf32, #tpu.memory_space<vmem>>, %arg7: memref<1x4x1xf32, #tpu.memory_space<vmem>>, %arg8: memref<1x256xf32, #tpu.memory_space<vmem>>, %arg9: memref<4x256xf32, #tpu.memory_space<vmem>>, %arg10: memref<4x256xf32, #tpu.memory_space<vmem>>) attributes {dimension_semantics = [#tpu.dimension_semantics<parallel>, #tpu.dimension_semantics<arbitrary>, #tpu.dimension_semantics<arbitrary>], iteration_bounds = array<i64: 1, 2, 1>, scalar_prefetch = 0 : i64, scratch_operands = 3 : i64, tpu.core_type = #tpu.core_type<tc>, window_params = [{transform_indices = @transform_0, window_bounds = array<i64: 1, 4, 256>}, {transform_indices = @transform_1, window_bounds = array<i64: 1, 1, 256>}, {transform_indices = @transform_2, window_bounds = array<i64: 1, 1, 1>}, {transform_indices = @transform_3, window_bounds = array<i64: 1, 4, 1>}, {transform_indices = @transform_4, window_bounds = array<i64: 1, 4, 1>}]} {
    %c0_i32 = arith.constant 0 : i32
    %0 = arith.cmpi eq, %arg1, %c0_i32 : i32
    %c0_i32_0 = arith.constant 0 : i32
    %1 = arith.cmpi eq, %arg2, %c0_i32_0 : i32
    %2 = arith.andi %0, %1 : i1
    %3 = arith.extui %2 : i1 to i32
    %c0_i32_1 = arith.constant 0 : i32
    %4 = arith.cmpi ne, %3, %c0_i32_1 : i32
    scf.if %4 {
      %cst_28 = arith.constant 0.000000e+00 : f32
      %62 = vector.broadcast %cst_28 : f32 to vector<1x256xf32>
      %c0_29 = arith.constant 0 : index
      %c0_30 = arith.constant 0 : index
      %63 = vector.load %arg8[%c0_29, %c0_30] : memref<1x256xf32, #tpu.memory_space<vmem>>, vector<1x256xf32>
      tpu.vector_store %arg8[%c0_29, %c0_30], %62 {strides = array<i32>} : memref<1x256xf32, #tpu.memory_space<vmem>>, vector<1x256xf32>,
      %cst_31 = arith.constant 0.000000e+00 : f32
      %64 = vector.broadcast %cst_31 : f32 to vector<4x256xf32>
      %c0_32 = arith.constant 0 : index
      %c0_33 = arith.constant 0 : index
      %65 = vector.load %arg9[%c0_32, %c0_33] : memref<4x256xf32, #tpu.memory_space<vmem>>, vector<4x256xf32>
      tpu.vector_store %arg9[%c0_32, %c0_33], %64 {strides = array<i32>} : memref<4x256xf32, #tpu.memory_space<vmem>>, vector<4x256xf32>,
      %cst_34 = arith.constant 0.000000e+00 : f32
      %66 = vector.broadcast %cst_34 : f32 to vector<4x256xf32>
      %c0_35 = arith.constant 0 : index
      %c0_36 = arith.constant 0 : index
      %67 = vector.load %arg10[%c0_35, %c0_36] : memref<4x256xf32, #tpu.memory_space<vmem>>, vector<4x256xf32>
      tpu.vector_store %arg10[%c0_35, %c0_36], %66 {strides = array<i32>} : memref<4x256xf32, #tpu.memory_space<vmem>>, vector<4x256xf32>,
    } else {
    }
    %c0 = arith.constant 0 : index
    %c0_2 = arith.constant 0 : index
    %c0_3 = arith.constant 0 : index
    %5 = vector.load %arg3[%c0, %c0_2, %c0_3] : memref<1x4x256xf32, #tpu.memory_space<vmem>>, vector<1x4x256xf32>
    %6 = vector.shape_cast %5 : vector<1x4x256xf32> to vector<4x256xf32>
    %c0_4 = arith.constant 0 : index
    %c0_5 = arith.constant 0 : index
    %c0_6 = arith.constant 0 : index
    %7 = vector.load %arg4[%c0_4, %c0_5, %c0_6] : memref<1x1x256xi32, #tpu.memory_space<vmem>>, vector<1x1x256xi32>
    %8 = vector.shape_cast %7 : vector<1x1x256xi32> to vector<1x256xi32>
    %c1_i32 = arith.constant 1 : i32
    %9 = arith.muli %arg0, %c1_i32 : i32
    %10 = arith.addi %9, %arg2 : i32
    %c256_i32 = arith.constant 256 : i32
    %11 = arith.muli %10, %c256_i32 : i32
    %12 = tpu.iota {dimensions = array<i32: 1>} : vector<1x256xi32>
    %13 = vector.broadcast %11 : i32 to vector<1x256xi32>
    %14 = arith.addi %13, %12 : vector<1x256xi32>
    %c256_i32_7 = arith.constant 256 : i32
    %15 = vector.broadcast %c256_i32_7 : i32 to vector<1x256xi32>
    %16 = arith.cmpi slt, %14, %15 : vector<1x256xi32>
    %17 = arith.extui %16 : vector<1x256xi1> to vector<1x256xi32>
    %18 = arith.sitofp %17 : vector<1x256xi32> to vector<1x256xf32>
    %cst = arith.constant 0.000000e+00 : f32
    %19 = vector.shape_cast %16 : vector<1x256xi1> to vector<1x256xi1>
    %20 = vector.broadcast %19 : vector<1x256xi1> to vector<4x256xi1>
    %21 = vector.broadcast %cst : f32 to vector<4x256xf32>
    %22 = arith.select %20, %6, %21 : vector<4x256xi1>, vector<4x256xf32>
    %23 = tpu.iota {dimensions = array<i32: 0>} : vector<4x1xi32>
    %24 = vector.broadcast %23 : vector<4x1xi32> to vector<4x256xi32>
    %25 = vector.broadcast %8 : vector<1x256xi32> to vector<4x256xi32>
    %26 = arith.cmpi eq, %24, %25 : vector<4x256xi32>
    %cst_8 = arith.constant dense<0xFF800000> : vector<256xf32>
    %27 = vector.multi_reduction <maximumf>, %22, %cst_8 [0] : vector<4x256xf32> to vector<256xf32>
    %28 = vector.shape_cast %27 : vector<256xf32> to vector<1x256xf32>
    %29 = vector.broadcast %28 : vector<1x256xf32> to vector<4x256xf32>
    %30 = arith.subf %22, %29 : vector<4x256xf32>
    %31 = math.exp %30 : vector<4x256xf32>
    %cst_9 = arith.constant dense<0.000000e+00> : vector<256xf32>
    %32 = vector.multi_reduction <add>, %31, %cst_9 [0] : vector<4x256xf32> to vector<256xf32>
    %33 = vector.shape_cast %32 : vector<256xf32> to vector<1x256xf32>
    %34 = tpu.reciprocal %33 : vector<1x256xf32> -> vector<1x256xf32>
    %35 = arith.mulf %34, %18 : vector<1x256xf32>
    %36 = math.log %33 : vector<1x256xf32>
    %37 = arith.addf %28, %36 : vector<1x256xf32>
    %38 = vector.broadcast %35 : vector<1x256xf32> to vector<4x256xf32>
    %39 = arith.mulf %31, %38 : vector<4x256xf32>
    %cst_10 = arith.constant 0.000000e+00 : f32
    %40 = vector.broadcast %cst_10 : f32 to vector<4x256xf32>
    %41 = arith.select %26, %22, %40 : vector<4x256xi1>, vector<4x256xf32>
    %cst_11 = arith.constant dense<0.000000e+00> : vector<256xf32>
    %42 = vector.multi_reduction <add>, %41, %cst_11 [0] : vector<4x256xf32> to vector<256xf32>
    %43 = vector.shape_cast %42 : vector<256xf32> to vector<1x256xf32>
    %c0_12 = arith.constant 0 : index
    %c0_13 = arith.constant 0 : index
    %44 = vector.load %arg8[%c0_12, %c0_13] : memref<1x256xf32, #tpu.memory_space<vmem>>, vector<1x256xf32>
    %45 = arith.subf %37, %43 : vector<1x256xf32>
    %46 = arith.mulf %45, %18 : vector<1x256xf32>
    %47 = arith.addf %44, %46 : vector<1x256xf32>
    %c0_14 = arith.constant 0 : index
    %c0_15 = arith.constant 0 : index
    %48 = vector.load %arg8[%c0_14, %c0_15] : memref<1x256xf32, #tpu.memory_space<vmem>>, vector<1x256xf32>
    tpu.vector_store %arg8[%c0_14, %c0_15], %47 {strides = array<i32>} : memref<1x256xf32, #tpu.memory_space<vmem>>, vector<1x256xf32>,
    %c0_16 = arith.constant 0 : index
    %c0_17 = arith.constant 0 : index
    %49 = vector.load %arg9[%c0_16, %c0_17] : memref<4x256xf32, #tpu.memory_space<vmem>>, vector<4x256xf32>
    %cst_18 = arith.constant 0.000000e+00 : f32
    %50 = vector.broadcast %cst_18 : f32 to vector<4x256xf32>
    %51 = arith.select %26, %39, %50 : vector<4x256xi1>, vector<4x256xf32>
    %52 = arith.addf %49, %51 : vector<4x256xf32>
    %c0_19 = arith.constant 0 : index
    %c0_20 = arith.constant 0 : index
    %53 = vector.load %arg9[%c0_19, %c0_20] : memref<4x256xf32, #tpu.memory_space<vmem>>, vector<4x256xf32>
    tpu.vector_store %arg9[%c0_19, %c0_20], %52 {strides = array<i32>} : memref<4x256xf32, #tpu.memory_space<vmem>>, vector<4x256xf32>,
    %c0_21 = arith.constant 0 : index
    %c0_22 = arith.constant 0 : index
    %54 = vector.load %arg10[%c0_21, %c0_22] : memref<4x256xf32, #tpu.memory_space<vmem>>, vector<4x256xf32>
    %55 = arith.addf %54, %39 : vector<4x256xf32>
    %c0_23 = arith.constant 0 : index
    %c0_24 = arith.constant 0 : index
    %56 = vector.load %arg10[%c0_23, %c0_24] : memref<4x256xf32, #tpu.memory_space<vmem>>, vector<4x256xf32>
    tpu.vector_store %arg10[%c0_23, %c0_24], %55 {strides = array<i32>} : memref<4x256xf32, #tpu.memory_space<vmem>>, vector<4x256xf32>,
    %c1_i32_25 = arith.constant 1 : i32
    %57 = arith.cmpi eq, %arg1, %c1_i32_25 : i32
    %c0_i32_26 = arith.constant 0 : i32
    %58 = arith.cmpi eq, %arg2, %c0_i32_26 : i32
    %59 = arith.andi %57, %58 : i1
    %60 = arith.extui %59 : i1 to i32
    %c0_i32_27 = arith.constant 0 : i32
    %61 = arith.cmpi ne, %60, %c0_i32_27 : i32
    scf.if %61 {
      %c0_28 = arith.constant 0 : index
      %c0_29 = arith.constant 0 : index
      %62 = vector.load %arg8[%c0_28, %c0_29] : memref<1x256xf32, #tpu.memory_space<vmem>>, vector<1x256xf32>
      %63 = vector.shape_cast %62 : vector<1x256xf32> to vector<1x1x256xf32>
      %cst_30 = arith.constant dense<0.000000e+00> : vector<1xf32>
      %64 = vector.multi_reduction <add>, %63, %cst_30 [1, 2] : vector<1x1x256xf32> to vector<1xf32>
      %65 = vector.shape_cast %64 : vector<1xf32> to vector<1x1x1xf32>
      %66 = vector.extract %65[0, 0, 0] : f32 from vector<1x1x1xf32>
      %67 = vector.broadcast %66 : f32 to vector<1x1xf32>
      %c0_31 = arith.constant 0 : index
      %c0_32 = arith.constant 0 : index
      %c0_33 = arith.constant 0 : index
      %68 = vector.load %arg5[%c0_31, %c0_32, %c0_33] : memref<1x1x1xf32, #tpu.memory_space<vmem>>, vector<1x1x1xf32>
      %69 = vector.shape_cast %68 : vector<1x1x1xf32> to vector<1x1xf32>
      %70 = vector.shape_cast %67 : vector<1x1xf32> to vector<1x1x1xf32>
      tpu.vector_store %arg5[%c0_31, %c0_32, %c0_33], %70 {strides = array<i32>} : memref<1x1x1xf32, #tpu.memory_space<vmem>>, vector<1x1x1xf32>,
      %c0_34 = arith.constant 0 : index
      %c0_35 = arith.constant 0 : index
      %71 = vector.load %arg9[%c0_34, %c0_35] : memref<4x256xf32, #tpu.memory_space<vmem>>, vector<4x256xf32>
      %cst_36 = arith.constant dense<0.000000e+00> : vector<4xf32>
      %72 = vector.multi_reduction <add>, %71, %cst_36 [1] : vector<4x256xf32> to vector<4xf32>
      %73 = vector.shape_cast %72 : vector<4xf32> to vector<4x1xf32>
      %c0_37 = arith.constant 0 : index
      %c0_38 = arith.constant 0 : index
      %c0_39 = arith.constant 0 : index
      %74 = vector.load %arg6[%c0_37, %c0_38, %c0_39] : memref<1x4x1xf32, #tpu.memory_space<vmem>>, vector<1x4x1xf32>
      %75 = vector.shape_cast %74 : vector<1x4x1xf32> to vector<4x1xf32>
      %76 = vector.shape_cast %73 : vector<4x1xf32> to vector<1x4x1xf32>
      tpu.vector_store %arg6[%c0_37, %c0_38, %c0_39], %76 {strides = array<i32>} : memref<1x4x1xf32, #tpu.memory_space<vmem>>, vector<1x4x1xf32>,
      %c0_40 = arith.constant 0 : index
      %c0_41 = arith.constant 0 : index
      %77 = vector.load %arg10[%c0_40, %c0_41] : memref<4x256xf32, #tpu.memory_space<vmem>>, vector<4x256xf32>
      %cst_42 = arith.constant dense<0.000000e+00> : vector<4xf32>
      %78 = vector.multi_reduction <add>, %77, %cst_42 [1] : vector<4x256xf32> to vector<4xf32>
      %79 = vector.shape_cast %78 : vector<4xf32> to vector<4x1xf32>
      %c0_43 = arith.constant 0 : index
      %c0_44 = arith.constant 0 : index
      %c0_45 = arith.constant 0 : index
      %80 = vector.load %arg7[%c0_43, %c0_44, %c0_45] : memref<1x4x1xf32, #tpu.memory_space<vmem>>, vector<1x4x1xf32>
      %81 = vector.shape_cast %80 : vector<1x4x1xf32> to vector<4x1xf32>
      %82 = vector.shape_cast %79 : vector<4x1xf32> to vector<1x4x1xf32>
      tpu.vector_store %arg7[%c0_43, %c0_44, %c0_45], %82 {strides = array<i32>} : memref<1x4x1xf32, #tpu.memory_space<vmem>>, vector<1x4x1xf32>,
    } else {
    }
    return
  }
  func.func @transform_0(%arg0: i32, %arg1: i32, %arg2: i32) -> (i32, i32, i32) {
    %c1_i32 = arith.constant 1 : i32
    %0 = arith.muli %arg0, %c1_i32 : i32
    %1 = arith.addi %0, %arg2 : i32
    %c0_i32 = arith.constant 0 : i32
    %2 = arith.minsi %1, %c0_i32 : i32
    %c0_i32_0 = arith.constant 0 : i32
    %c0_i32_1 = arith.constant 0 : i32
    return %arg1, %c0_i32_0, %2 : i32, i32, i32
  }
  func.func @transform_1(%arg0: i32, %arg1: i32, %arg2: i32) -> (i32, i32, i32) {
    %c1_i32 = arith.constant 1 : i32
    %0 = arith.muli %arg0, %c1_i32 : i32
    %1 = arith.addi %0, %arg2 : i32
    %c0_i32 = arith.constant 0 : i32
    %2 = arith.minsi %1, %c0_i32 : i32
    %c0_i32_0 = arith.constant 0 : i32
    %c0_i32_1 = arith.constant 0 : i32
    return %arg1, %c0_i32_0, %2 : i32, i32, i32
  }
  func.func @transform_2(%arg0: i32, %arg1: i32, %arg2: i32) -> (i32, i32, i32) {
    %c0_i32 = arith.constant 0 : i32
    %c0_i32_0 = arith.constant 0 : i32
    %c0_i32_1 = arith.constant 0 : i32
    return %arg0, %c0_i32, %c0_i32_0 : i32, i32, i32
  }
  func.func @transform_3(%arg0: i32, %arg1: i32, %arg2: i32) -> (i32, i32, i32) {
    %c0_i32 = arith.constant 0 : i32
    %c0_i32_0 = arith.constant 0 : i32
    %c0_i32_1 = arith.constant 0 : i32
    return %arg0, %c0_i32, %c0_i32_0 : i32, i32, i32
  }
  func.func @transform_4(%arg0: i32, %arg1: i32, %arg2: i32) -> (i32, i32, i32) {
    %c0_i32 = arith.constant 0 : i32
    %c0_i32_0 = arith.constant 0 : i32
    %c0_i32_1 = arith.constant 0 : i32
    return %arg0, %c0_i32, %c0_i32_0 : i32, i32, i32
  }
}

</mosaic_0001>

<llo_original>
// kernel: tpu_custom_call.1
$region0: #{tpu_custom_call.1}
  #allocation0 [shape = 'u32[]', space=smem, size = 0x4, offset = 0x4, fixed_abs, tag = 'smem constant byte address 0x4 - core index']
  #allocation1 [shape = 'u32[144,128]{1,0:T(1,128)}', space=vmem, size = 0x12000, scoped, tag = 'internal scratch']
  #allocation2 [shape = 'f32[1,256]{1,0:T(1,128)}', space=vmem, size = 0x400, scoped, tag = 'scratch operand']
  #allocation3 [shape = 'f32[4,256]{1,0:T(4,128)}', space=vmem, size = 0x1000, scoped, tag = 'scratch operand']
  #allocation4 [shape = 'f32[4,256]{1,0:T(4,128)}', space=vmem, size = 0x1000, scoped, tag = 'scratch operand']
  %s0 = inlined_call_operand.hbm [shape: f32[2,4,256], index: 0, kind: input, shape index: {}]
  %s1 = inlined_call_operand.hbm [shape: s32[2,1,256], index: 1, kind: input, shape index: {}]
  %s2 = inlined_call_operand.hbm [shape: f32[1,1,1], index: 2, kind: output, shape index: {0}]
  %s3 = inlined_call_operand.vmem [shape: f32[1,4,1], index: 3, kind: output, shape index: {1}]
  %s4 = inlined_call_operand.vmem [shape: f32[1,4,1], index: 4, kind: output, shape index: {2}]
  %5 = xla_tuple %s2, %s3, %s4
  %s6 = sld [smem:[#allocation0]]
  $region73: #{tpu_custom_call.1} parent=0
    _
  %s8 = ssub.s32 1, %s6
  %s9 = scalar_select 0, %s8, %s6
  $region1: #{tpu_custom_call.1} parent=0
    #allocation5 [shape = 'u8[8192]{0}', space=vmem, size = 0x2000, scoped, tag = 'input window, operand 0']
    #allocation6 [shape = 's32[2]{0}', space=sflag, size = 0x8, scoped, tag = 'scoped memory for tpu_custom_call.1']
    #allocation7 [shape = 's32[2]{0}', space=sflag, size = 0x8, scoped, tag = 'scoped memory for tpu_custom_call.1']
    #allocation8 [shape = 'u8[2048]{0}', space=vmem, size = 0x800, scoped, tag = 'input window, operand 1']
    #allocation9 [shape = 's32[2]{0}', space=sflag, size = 0x8, scoped, tag = 'scoped memory for tpu_custom_call.1']
    #allocation10 [shape = 'u8[512]{0}', space=vmem, size = 0x400, scoped, tag = 'output window, operand 0, single buffered']
    %10 = vsyncpa [#allocation6], 0
    %s11 = scalar_lea.sflag [#allocation6], 1
    %12 = vsyncpa %s11, 0
    %13 = vsyncpa [#allocation9], 0
    %s14 = scalar_lea.sflag [#allocation9], 1
    %15 = vsyncpa %s14, 0
    %16 = vsyncpa [#allocation7], 0
    loop: start=0, step=1, limit=4
    $region2: #{tpu_custom_call.1} parent=1 // loop_pre_header
      _
    $region3: #{tpu_custom_call.1} parent=1 // loop_header
      %s18 = sphi 0, %s22
      %p19 = scmp.ge.s32.totalorder %s18, 4
      %s25 = sphi 0, %s44
      %s26 = sphi 0, %s40
      %s27 = sphi 0, %s36
      %s28 = sphi 0, %s25
      %s29 = sphi 0, %s26
      %s30 = sphi 0, %s27
      %s31 = sphi 0, %s28
      %s32 = sphi 0, %s29
      %s33 = sphi 0, %s30
      %s55 = sphi 0, %s57
      %s58 = sphi 0, %s55
      %s59 = sphi 0, %s58
      %s75 = sphi 0, %s59
      %s89 = sphi 0, %s91
      %s92 = sphi 0, %s89
      %s93 = sphi 0, %s92
      %s109 = sphi 0, %s93
      %s115 = sphi 0, %s117
      %s118 = sphi 0, %s115
      %s119 = sphi 0, %s118
      %s135 = sphi 0, %s119
      %s141 = sphi 0, %s143
      %s144 = sphi 0, %s141
      %s145 = sphi 0, %s144
      %s161 = sphi 0, %s145
      %s167 = sphi 0, %s169
      %s170 = sphi 0, %s167
      %s171 = sphi 0, %s170
      %s187 = sphi 0, %s171
    $region4: #{tpu_custom_call.1} parent=1 // loop_header_branch
      %21 = sbr.rel (%p19) target = $region8
    $region5: #{tpu_custom_call.1} parent=1 // loop_body
      %s23 = ssub.s32 %s18, 1
      %s24 = ssub.s32 %s18, 2
      %s34 = sadd.s32 1, %s27
      %p35 = scmp.ge.s32.totalorder %s34, 1
      %s36 = scalar_select %p35, 0, %s34
      %s37 = sadd.s32 1, %s26
      %s38 = scalar_select %p35, %s37, %s26
      %p39 = scmp.ge.s32.totalorder %s38, 2
      %s40 = scalar_select %p39, 0, %s38
      %s41 = sadd.s32 1, %s25
      %s42 = scalar_select %p39, %s41, %s25
      %p43 = scmp.ge.s32.totalorder %s42, 1
      %s44 = scalar_select %p43, 0, %s42
      %s45 = sadd.s32 %s25, %s27
      %p46 = scmp.lt.s32.totalorder %s45, 0
      %s47 = scalar_select %p46, %s45, 0
      %s48 = sadd.s32 %s44, %s36
      %p49 = scmp.lt.s32.totalorder %s48, 0
      %s50 = scalar_select %p49, %s48, 0
      %s51 = ssub.s32 %s26, %s40
      %s52 = ssub.s32 %s47, %s50
      %s53 = sor.u32 %s51, %s52
      %p54 = scmp.eq.s32.totalorder %s53, 0
      %s56 = sadd.s32 %s55, 1
      %s57 = scalar_select %p54, %s55, %s56
      %p60 = pneg %p54
      %p61 = scmp.eq.s32.totalorder %s18, 1
      %p62 = por %p60, %p61
      %p63 = scmp.ne.s32.totalorder %s55, %s58
      %p64 = scmp.eq.s32.totalorder %s18, 0
      %p65 = por %p63, %p64
      %p66 = scmp.ne.s32.totalorder %s55, %s58
      %p67 = scmp.eq.s32.totalorder %s23, 1
      %p68 = por %p66, %p67
      %p69 = scmp.ne.s32.totalorder %s58, %s59
      %p70 = scmp.eq.s32.totalorder %s23, 0
      %p71 = por %p69, %p70
      %p72 = scmp.ne.s32.totalorder %s58, %s59
      %p73 = scmp.eq.s32.totalorder %s24, 1
      %p74 = por %p72, %p73
      %p76 = scmp.ne.s32.totalorder %s59, %s75
      %p77 = scmp.eq.s32.totalorder %s24, 0
      %p78 = por %p76, %p77
      %s79 = sadd.s32 %s25, %s27
      %p80 = scmp.lt.s32.totalorder %s79, 0
      %s81 = scalar_select %p80, %s79, 0
      %s82 = sadd.s32 %s44, %s36
      %p83 = scmp.lt.s32.totalorder %s82, 0
      %s84 = scalar_select %p83, %s82, 0
      %s85 = ssub.s32 %s26, %s40
      %s86 = ssub.s32 %s81, %s84
      %s87 = sor.u32 %s85, %s86
      %p88 = scmp.eq.s32.totalorder %s87, 0
      %s90 = sadd.s32 %s89, 1
      %s91 = scalar_select %p88, %s89, %s90
      %p94 = pneg %p88
      %p95 = scmp.eq.s32.totalorder %s18, 1
      %p96 = por %p94, %p95
      %p97 = scmp.ne.s32.totalorder %s89, %s92
      %p98 = scmp.eq.s32.totalorder %s18, 0
      %p99 = por %p97, %p98
      %p100 = scmp.ne.s32.totalorder %s89, %s92
      %p101 = scmp.eq.s32.totalorder %s23, 1
      %p102 = por %p100, %p101
      %p103 = scmp.ne.s32.totalorder %s92, %s93
      %p104 = scmp.eq.s32.totalorder %s23, 0
      %p105 = por %p103, %p104
      %p106 = scmp.ne.s32.totalorder %s92, %s93
      %p107 = scmp.eq.s32.totalorder %s24, 1
      %p108 = por %p106, %p107
      %p110 = scmp.ne.s32.totalorder %s93, %s109
      %p111 = scmp.eq.s32.totalorder %s24, 0
      %p112 = por %p110, %p111
      %s113 = ssub.s32 %s25, %s44
      %p114 = scmp.eq.s32.totalorder %s113, 0
      %s116 = sadd.s32 %s115, 1
      %s117 = scalar_select %p114, %s115, %s116
      %p120 = pneg %p114
      %p121 = scmp.eq.s32.totalorder %s18, 1
      %p122 = por %p120, %p121
      %p123 = scmp.ne.s32.totalorder %s115, %s118
      %p124 = scmp.eq.s32.totalorder %s18, 0
      %p125 = por %p123, %p124
      %p126 = scmp.ne.s32.totalorder %s115, %s118
      %p127 = scmp.eq.s32.totalorder %s23, 1
      %p128 = por %p126, %p127
      %p129 = scmp.ne.s32.totalorder %s118, %s119
      %p130 = scmp.eq.s32.totalorder %s23, 0
      %p131 = por %p129, %p130
      %p132 = scmp.ne.s32.totalorder %s118, %s119
      %p133 = scmp.eq.s32.totalorder %s24, 1
      %p134 = por %p132, %p133
      %p136 = scmp.ne.s32.totalorder %s119, %s135
      %p137 = scmp.eq.s32.totalorder %s24, 0
      %p138 = por %p136, %p137
      %s139 = ssub.s32 %s25, %s44
      %p140 = scmp.eq.s32.totalorder %s139, 0
      %s142 = sadd.s32 %s141, 1
      %s143 = scalar_select %p140, %s141, %s142
      %p146 = pneg %p140
      %p147 = scmp.eq.s32.totalorder %s18, 1
      %p148 = por %p146, %p147
      %p149 = scmp.ne.s32.totalorder %s141, %s144
      %p150 = scmp.eq.s32.totalorder %s18, 0
      %p151 = por %p149, %p150
      %p152 = scmp.ne.s32.totalorder %s141, %s144
      %p153 = scmp.eq.s32.totalorder %s23, 1
      %p154 = por %p152, %p153
      %p155 = scmp.ne.s32.totalorder %s144, %s145
      %p156 = scmp.eq.s32.totalorder %s23, 0
      %p157 = por %p155, %p156
      %p158 = scmp.ne.s32.totalorder %s144, %s145
      %p159 = scmp.eq.s32.totalorder %s24, 1
      %p160 = por %p158, %p159
      %p162 = scmp.ne.s32.totalorder %s145, %s161
      %p163 = scmp.eq.s32.totalorder %s24, 0
      %p164 = por %p162, %p163
      %s165 = ssub.s32 %s25, %s44
      %p166 = scmp.eq.s32.totalorder %s165, 0
      %s168 = sadd.s32 %s167, 1
      %s169 = scalar_select %p166, %s167, %s168
      %p172 = pneg %p166
      %p173 = scmp.eq.s32.totalorder %s18, 1
      %p174 = por %p172, %p173
      %p175 = scmp.ne.s32.totalorder %s167, %s170
      %p176 = scmp.eq.s32.totalorder %s18, 0
      %p177 = por %p175, %p176
      %p178 = scmp.ne.s32.totalorder %s167, %s170
      %p179 = scmp.eq.s32.totalorder %s23, 1
      %p180 = por %p178, %p179
      %p181 = scmp.ne.s32.totalorder %s170, %s171
      %p182 = scmp.eq.s32.totalorder %s23, 0
      %p183 = por %p181, %p182
      %p184 = scmp.ne.s32.totalorder %s170, %s171
      %p185 = scmp.eq.s32.totalorder %s24, 1
      %p186 = por %p184, %p185
      %p188 = scmp.ne.s32.totalorder %s171, %s187
      %p189 = scmp.eq.s32.totalorder %s24, 0
      %p190 = por %p188, %p189
      %p191 = scmp.le.s32.totalorder 1, %s18
      %p192 = scmp.lt.s32.totalorder %s18, 3
      %p193 = pnand %p191, %p192
      %p194 = pneg %p193
      // Predicated region
      $region9: #{tpu_custom_call.1} parent=5 // pred_check
        _
      $region10: #{tpu_custom_call.1} parent=5 // pred_check_branch
        %196 = sbr.rel (%p193) target = $region12
      $region11: #{tpu_custom_call.1} parent=5 // pred_region
        %s197 = ssub.s32 %s18, 1
      $region12: #{tpu_custom_call.1} parent=5 // pred_fallthru
        _
      %p198 = scmp.lt.s32.totalorder %s18, 2
      // Predicated region
      $region13: #{tpu_custom_call.1} parent=5 // pred_check
        %p199 = pneg %p198
      $region14: #{tpu_custom_call.1} parent=5 // pred_check_branch
        %201 = sbr.rel (%p199) target = $region16
      $region15: #{tpu_custom_call.1} parent=5 // pred_region
        // Predicated region
        $region17: #{tpu_custom_call.1} parent=15 // pred_check
          %p202 = pneg %p65
        $region18: #{tpu_custom_call.1} parent=15 // pred_check_branch
          %204 = sbr.rel (%p202) target = $region20
        $region19: #{tpu_custom_call.1} parent=15 // pred_region
          %s205 = sand.u32 %s55, 1
          %s206 = scalar_lea.sflag [#allocation6], %s205
          %s207 = sand.u32 %s55, 1
          %s208 = smul.addr %s207, 8
          %s209 = scalar_lea.vmem [#allocation5], %s208
          %s210 = sadd.s32 %s25, %s27
          %p211 = scmp.lt.s32.totalorder %s210, 0
          %s212 = scalar_select %p211, %s210, 0
          %s213 = smul.u32 2, %s212
          %s215 = ssub.s32 128, 128
          %216 = vsyncadd %s206, %s215
          %s217 = smul.addr %s26, 2
          %s218 = sadd.s32 %s213, %s217
          %s219 = smul.addr %s218, 64
          %s220 = scalar_lea.hbm %s0, %s219
          %s222 = sshll.u32 %s209, 4
          %s223 = int_to_ptr.vmem [resolvable:$true] %s222
          %225 = dma.hbm_to_vmem [thread:$0]  %s220, 128, %s223, %s206
        $region20: #{tpu_custom_call.1} parent=15 // pred_fallthru
          _
        // Predicated region
        $region21: #{tpu_custom_call.1} parent=15 // pred_check
          %p226 = pneg %p99
        $region22: #{tpu_custom_call.1} parent=15 // pred_check_branch
          %228 = sbr.rel (%p226) target = $region24
        $region23: #{tpu_custom_call.1} parent=15 // pred_region
          %s229 = sand.u32 %s89, 1
          %s230 = scalar_lea.sflag [#allocation9], %s229
          %s231 = sand.u32 %s89, 1
          %s232 = smul.addr %s231, 2
          %s233 = scalar_lea.vmem [#allocation8], %s232
          %s234 = sadd.s32 %s25, %s27
          %p235 = scmp.lt.s32.totalorder %s234, 0
          %s236 = scalar_select %p235, %s234, 0
          %s237 = smul.u32 2, %s236
          %s239 = ssub.s32 32, 32
          %240 = vsyncadd %s230, %s239
          %s241 = smul.addr %s26, 2
          %s242 = sadd.s32 %s237, %s241
          %s243 = smul.addr %s242, 16
          %s244 = scalar_lea.hbm %s1, %s243
          %s246 = sshll.u32 %s233, 4
          %s247 = int_to_ptr.vmem [resolvable:$true] %s246
          %249 = dma.hbm_to_vmem [thread:$0]  %s244, 32, %s247, %s230
        $region24: #{tpu_custom_call.1} parent=15 // pred_fallthru
          _
      $region16: #{tpu_custom_call.1} parent=5 // pred_fallthru
        _
      %p250 = scmp.le.s32.totalorder 1, %s18
      %p251 = scmp.lt.s32.totalorder %s18, 3
      %p252 = pnand %p250, %p251
      %p253 = pneg %p252
      // Predicated region
      $region25: #{tpu_custom_call.1} parent=5 // pred_check
        _
      $region26: #{tpu_custom_call.1} parent=5 // pred_check_branch
        %255 = sbr.rel (%p252) target = $region28
      $region27: #{tpu_custom_call.1} parent=5 // pred_region
        %s256 = ssub.s32 %s18, 1
        %s257 = sand.u32 %s58, 1
        %s258 = scalar_lea.sflag [#allocation6], %s257
        %s259 = sand.u32 %s58, 1
        %s260 = smul.addr %s259, 8
        %s261 = scalar_lea.vmem [#allocation5], %s260
        // Predicated region
        $region29: #{tpu_custom_call.1} parent=27 // pred_check
          %p262 = pneg %p71
        $region30: #{tpu_custom_call.1} parent=27 // pred_check_branch
          %264 = sbr.rel (%p262) target = $region32
        $region31: #{tpu_custom_call.1} parent=27 // pred_region
          %265 = dma.done %s258, 128
        $region32: #{tpu_custom_call.1} parent=27 // pred_fallthru
          _
        %s266 = sand.u32 %s92, 1
        %s267 = scalar_lea.sflag [#allocation9], %s266
        %s268 = sand.u32 %s92, 1
        %s269 = smul.addr %s268, 2
        %s270 = scalar_lea.vmem [#allocation8], %s269
        // Predicated region
        $region33: #{tpu_custom_call.1} parent=27 // pred_check
          %p271 = pneg %p105
        $region34: #{tpu_custom_call.1} parent=27 // pred_check_branch
          %273 = sbr.rel (%p271) target = $region36
        $region35: #{tpu_custom_call.1} parent=27 // pred_region
          %274 = dma.done %s267, 32
        $region36: #{tpu_custom_call.1} parent=27 // pred_fallthru
          _
        %s275 = sand.u32 %s58, 1
        %s276 = scalar_lea.sflag [#allocation6], %s275
        %s277 = sand.u32 %s58, 1
        %s278 = smul.addr %s277, 8
        %s279 = scalar_lea.vmem [#allocation5], %s278
        %p280 = pneg %p71
        %p281 = pneg %p68
        %s282 = sand.u32 %s92, 1
        %s283 = scalar_lea.sflag [#allocation9], %s282
        %s284 = sand.u32 %s92, 1
        %s285 = smul.addr %s284, 2
        %s286 = scalar_lea.vmem [#allocation8], %s285
        %p287 = pneg %p105
        %p288 = pneg %p102
        %p289 = pneg %p131
        %p290 = pneg %p128
        %p291 = pneg %p157
        %p292 = pneg %p154
        %p293 = scmp.lt.s32.totalorder %s28, 0
        %s294 = scalar_select %p293, %s28, 0
        %s295 = smul.addr %s294, 4
        %s296 = scalar_lea.vmem %s3, %s295
        %p297 = pneg %p183
        %p298 = pneg %p180
        %p299 = scmp.lt.s32.totalorder %s28, 0
        %s300 = scalar_select %p299, %s28, 0
        %s301 = smul.addr %s300, 4
        %s302 = scalar_lea.vmem %s4, %s301
        %s303 = sadd.s32 %s28, %s30
        %p304 = scmp.lt.s32.totalorder %s303, 0
        %s305 = scalar_select %p304, %s303, 0
        %s306 = smul.u32 2, %s305
        %s307 = sadd.s32 %s28, %s30
        %p308 = scmp.lt.s32.totalorder %s307, 0
        %s309 = scalar_select %p308, %s307, 0
        %s310 = smul.u32 2, %s309
        %p311 = scmp.lt.s32.totalorder %s28, 0
        %s312 = scalar_select %p311, %s28, 0
        %s313 = smul.addr %s312, 4
        %s314 = scalar_lea.vmem %s3, %s313
        %p315 = scmp.lt.s32.totalorder %s28, 0
        %s316 = scalar_select %p315, %s28, 0
        %s317 = smul.addr %s316, 4
        %s318 = scalar_lea.vmem %s4, %s317
        %p319 = scmp.eq.s32.totalorder %s29, 0
        %p320 = scmp.eq.s32.totalorder %s30, 0
        %p321 = pnand %p319, %p320
        %p322 = pneg %p321
        // Predicated region
        $region37: #{tpu_custom_call.1} parent=27 // pred_check
          _
        $region38: #{tpu_custom_call.1} parent=27 // pred_check_branch
          %324 = sbr.rel (%p321) target = $region40
        $region39: #{tpu_custom_call.1} parent=27 // pred_region
          %v325 = vlaneseq
          %vm326 = vcmp.ge.s32.totalorder %v325, 0
          %vm327 = vcmp.lt.s32.totalorder %v325, 256
          %vm328 = vmand %vm326, %vm327
          %329 = vst.msk [vmem:[#allocation2] sm:$0x3] %vm328, 0.0
          %330 = vst [vmem:[#allocation3] sm:$0xff] 0.0
          %331 = vst [vmem:[#allocation4] sm:$0xff] 0.0
        $region40: #{tpu_custom_call.1} parent=27 // pred_fallthru
          _
        %v332 = vld [vmem:[%s261] sm:$0xff]
        %v333 = vld [vmem:[%s270] sm:$0x3]
        %s334 = sadd.s32 %s28, %s30
        %s335 = smul.u32 %s334, 256
        %v336 = vlaneseq
        %v337 = vand.u32 %v336, 127
        %v338 = vadd.s32 %v337, 128
        %v339 = vstv %s335
        %v340 = vadd.s32 %v339, %v337
        %v341 = vadd.s32 %v339, %v338
        %vm342 = vcmp.lt.s32.totalorder %v340, 256
        %vm343 = vcmp.lt.s32.totalorder %v341, 256
        %v344 = vsel %vm342, 1, 0
        %v345 = vsel %vm343, 1, 0
        %v346 = vcvt.s32.f32 %v344
        %v347 = vcvt.s32.f32 %v345
        %vm348 = vcmp.eq.s32.totalorder %v344, 1
        %vm349 = vcmp.eq.s32.totalorder %v345, 1
        %v351 = vcombine.high %v332, %v332
        %v353 = vsel %vm348, %v332, 0.0
        %v354 = vsel %vm349, %v351, 0.0
        %v355 = vlaneseq
        %v356 = vshrl.u32 %v355, 7
        %v357 = vlaneseq
        %v358 = vshrl.u32 %v357, 7
        %v359 = vsub.s32 0, %v358
        %v360 = vrot.slane %v333, %v359
        %v361 = vlaneseq
        %v362 = vshrl.u32 %v361, 7
        %v363 = vsub.s32 1, %v362
        %v364 = vrot.slane %v333, %v363
        %vm365 = vcmp.eq.s32.totalorder %v356, %v360
        %vm366 = vcmp.eq.s32.totalorder %v356, %v364
        %vm367 = vcmask 1043456
        %v368 = vsel %vm367, %v353, -inf
        %v369 = vrot.slane %v368, 4
        %v370 = vmax.f32 %v368, %v369
        %v371 = vrot.slane %v370, 2
        %v372 = vmax.f32 %v370, %v371
        %v373 = vrot.slane %v372, 1
        %v374 = vmax.f32 %v372, %v373
        %v375 = vsel %vm367, %v354, -inf
        %v376 = vrot.slane %v375, 4
        %v377 = vmax.f32 %v375, %v376
        %v378 = vrot.slane %v377, 2
        %v379 = vmax.f32 %v377, %v378
        %v380 = vrot.slane %v379, 1
        %v381 = vmax.f32 %v379, %v380
        %v382 = vsub.f32 %v353, %v374
        %v383 = vsub.f32 %v354, %v381
        %v384 = vmul.f32 %v382, 1.442695
        %v385 = vpow.pop %v384
        %v386 = vmul.f32 %v383, 1.442695
        %v387 = vpow.pop %v386
        %v388 = vsel %vm367, %v385, 0.0
        %v389 = vrot.slane %v388, 4
        %v390 = vadd.f32 %v388, %v389
        %v391 = vrot.slane %v390, 2
        %v392 = vadd.f32 %v390, %v391
        %v393 = vrot.slane %v392, 1
        %v394 = vadd.f32 %v392, %v393
        %v395 = vsel %vm367, %v387, 0.0
        %v396 = vrot.slane %v395, 4
        %v397 = vadd.f32 %v395, %v396
        %v398 = vrot.slane %v397, 2
        %v399 = vadd.f32 %v397, %v398
        %v400 = vrot.slane %v399, 1
        %v401 = vadd.f32 %v399, %v400
        %v402 = vrcp.pop %v394
        %v403 = vrcp.pop %v401
        %v404 = vmul.f32 %v402, %v346
        %v405 = vmul.f32 %v403, %v347
        %v406 = vlog2.pop %v394
        %v407 = vmul.f32 %v406, 0.6931472
        %v408 = vlog2.pop %v401
        %v409 = vmul.f32 %v408, 0.6931472
        %v410 = vadd.f32 %v374, %v407
        %v411 = vadd.f32 %v381, %v409
        %v412 = vmul.f32 %v385, %v404
        %v413 = vmul.f32 %v387, %v405
        %v414 = vsel %vm365, %v353, 0.0
        %v415 = vsel %vm366, %v354, 0.0
        %v416 = vsel %vm367, %v414, 0.0
        %v417 = vrot.slane %v416, 4
        %v418 = vadd.f32 %v416, %v417
        %v419 = vrot.slane %v418, 2
        %v420 = vadd.f32 %v418, %v419
        %v421 = vrot.slane %v420, 1
        %v422 = vadd.f32 %v420, %v421
        %v423 = vsel %vm367, %v415, 0.0
        %v424 = vrot.slane %v423, 4
        %v425 = vadd.f32 %v423, %v424
        %v426 = vrot.slane %v425, 2
        %v427 = vadd.f32 %v425, %v426
        %v428 = vrot.slane %v427, 1
        %v429 = vadd.f32 %v427, %v428
        %v430 = vld [vmem:[#allocation2] sm:$0x3]
        %v431 = vsub.f32 %v410, %v422
        %v432 = vsub.f32 %v411, %v429
        %v433 = vmul.f32 %v431, %v346
        %v434 = vmul.f32 %v432, %v347
        %v437 = vcombine.low %v433, %v434
        %v439 = vunpack.c.l.s4 1966171168
        %v440 = vunpack.c.0.s8 %v439
        %v441 = vlaneseq
        %v442 = vshrl.u32 %v441, 7
        %v443 = vsub.s32 %v440, %v442
        %v444 = vrot.slane %v437, %v443
        %v446 = vunpack.c.l.s4 1966171168
        %v447 = vunpack.c.0.s8 %v446
        %v448 = vlaneseq
        %v449 = vshrl.u32 %v448, 7
        %v450 = vsub.s32 %v447, %v449
        %v451 = vrot.slane %v444, %v450
        %v453 = vadd.f32 %v430, %v451
        %v454 = vlaneseq
        %vm455 = vcmp.ge.s32.totalorder %v454, 0
        %vm456 = vcmp.lt.s32.totalorder %v454, 256
        %vm457 = vmand %vm455, %vm456
        %458 = vst.msk [vmem:[#allocation2] sm:$0x3] %vm457, %v453
        %v459 = vld [vmem:[#allocation3] sm:$0xff]
        %v460 = vsel %vm365, %v412, 0.0
        %v461 = vsel %vm366, %v413, 0.0
        %v464 = vcombine.low %v460, %v461
        %v466 = vadd.f32 %v459, %v464
        %467 = vst [vmem:[#allocation3] sm:$0xff] %v466
        %v468 = vld [vmem:[#allocation4] sm:$0xff]
        %v471 = vcombine.low %v412, %v413
        %v473 = vadd.f32 %v468, %v471
        %474 = vst [vmem:[#allocation4] sm:$0xff] %v473
        %p475 = scmp.eq.s32.totalorder %s29, 1
        %p476 = pnand %p475, %p320
        %p477 = pneg %p476
        // Predicated region
        $region41: #{tpu_custom_call.1} parent=27 // pred_check
          _
        $region42: #{tpu_custom_call.1} parent=27 // pred_check_branch
          %479 = sbr.rel (%p476) target = $region44
        $region43: #{tpu_custom_call.1} parent=27 // pred_region
          %v480 = vld [vmem:[#allocation2] sm:$0x3]
          %v482 = vlaneseq
          %v483 = vshrl.u32 %v482, 7
          %v484 = vsub.s32 0, %v483
          %v485 = vrot.slane %v480, %v484
          %v486 = vlaneseq
          %v487 = vshrl.u32 %v486, 7
          %v488 = vsub.s32 1, %v487
          %v489 = vrot.slane %v480, %v488
          %vm492 = vcmask 1040384
          %v493 = vsel %vm492, %v485, 0.0
          %v494 = vsel %vm492, %v489, 0.0
          %v495 = vadd.f32 %v493, %v494
          %496 = vadd.xlane.f32.xlu0 %v495
          %v497 = vpop.xlane.xlu0 %496
          %v498 = vrot.slane %v497, 4
          %v499 = vadd.f32 %v497, %v498
          %v500 = vrot.slane %v499, 2
          %v501 = vadd.f32 %v499, %v500
          %v502 = vrot.slane %v501, 1
          %v503 = vadd.f32 %v501, %v502
          %s504 = vtos %v503
          %v505 = vstv %s504
          %vm506 = vcmask 0
          %507 = vst.msk [vmem:[#allocation10] sm:$0x1] %vm506, %v505
          %v508 = vld [vmem:[#allocation3] sm:$0xff]
          %v510 = vcombine.high %v508, %v508
          %v512 = vsel %vm367, %v508, 0.0
          %v513 = vsel %vm367, %v510, 0.0
          %v514 = vadd.f32 %v512, %v513
          %515 = vadd.xlane.f32.xlu0 %v514
          %v516 = vpop.xlane.xlu0 %515
          %vm517 = vcmask 3072
          %518 = vst.msk [vmem:[%s314] sm:$0xf] %vm517, %v516
          %v519 = vld [vmem:[#allocation4] sm:$0xff]
          %v521 = vcombine.high %v519, %v519
          %v523 = vsel %vm367, %v519, 0.0
          %v524 = vsel %vm367, %v521, 0.0
          %v525 = vadd.f32 %v523, %v524
          %526 = vadd.xlane.f32.xlu0 %v525
          %v527 = vpop.xlane.xlu0 %526
          %528 = vst.msk [vmem:[%s318] sm:$0xf] %vm517, %v527
        $region44: #{tpu_custom_call.1} parent=27 // pred_fallthru
          _
        %p529 = scmp.lt.s32.totalorder %s28, 0
        %s530 = scalar_select %p529, %s28, 0
        %s531 = smul.addr %s530, 4
        %s532 = scalar_lea.vmem %s3, %s531
        %p533 = scmp.lt.s32.totalorder %s28, 0
        %s534 = scalar_select %p533, %s28, 0
        %s535 = smul.addr %s534, 4
        %s536 = scalar_lea.vmem %s4, %s535
        // Predicated region
        $region45: #{tpu_custom_call.1} parent=27 // pred_check
          %p537 = pneg %p128
        $region46: #{tpu_custom_call.1} parent=27 // pred_check_branch
          %539 = sbr.rel (%p537) target = $region48
        $region47: #{tpu_custom_call.1} parent=27 // pred_region
          %s541 = ssub.s32 16, 16
          %542 = vsyncadd [#allocation7], %s541
          %s543 = smul.addr %s28, 16
          %s544 = scalar_lea.hbm %s2, %s543
          %s546 = sshll.u32 [#allocation10], 4
          %s547 = int_to_ptr.vmem [resolvable:$true] %s546
          %549 = dma.vmem_to_hbm [thread:$0]  %s547, 16, %s544, [#allocation7]
        $region48: #{tpu_custom_call.1} parent=27 // pred_fallthru
          _
        // Predicated region
        $region49: #{tpu_custom_call.1} parent=27 // pred_check
          %p550 = pneg %p154
        $region50: #{tpu_custom_call.1} parent=27 // pred_check_branch
          %552 = sbr.rel (%p550) target = $region52
        $region51: #{tpu_custom_call.1} parent=27 // pred_region
          _
        $region52: #{tpu_custom_call.1} parent=27 // pred_fallthru
          _
        // Predicated region
        $region53: #{tpu_custom_call.1} parent=27 // pred_check
          %p553 = pneg %p180
        $region54: #{tpu_custom_call.1} parent=27 // pred_check_branch
          %555 = sbr.rel (%p553) target = $region56
        $region55: #{tpu_custom_call.1} parent=27 // pred_region
          _
        $region56: #{tpu_custom_call.1} parent=27 // pred_fallthru
          _
        // Predicated region
        $region57: #{tpu_custom_call.1} parent=27 // pred_check
          %p556 = pneg %p128
        $region58: #{tpu_custom_call.1} parent=27 // pred_check_branch
          %558 = sbr.rel (%p556) target = $region60
        $region59: #{tpu_custom_call.1} parent=27 // pred_region
          %559 = dma.done [#allocation7], 16
        $region60: #{tpu_custom_call.1} parent=27 // pred_fallthru
          _
        // Predicated region
        $region61: #{tpu_custom_call.1} parent=27 // pred_check
          %p560 = pneg %p154
        $region62: #{tpu_custom_call.1} parent=27 // pred_check_branch
          %562 = sbr.rel (%p560) target = $region64
        $region63: #{tpu_custom_call.1} parent=27 // pred_region
          %p563 = scmp.lt.s32.totalorder %s28, 0
          %s564 = scalar_select %p563, %s28, 0
          %s565 = smul.addr %s564, 4
          %s566 = scalar_lea.vmem %s3, %s565
        $region64: #{tpu_custom_call.1} parent=27 // pred_fallthru
          _
        // Predicated region
        $region65: #{tpu_custom_call.1} parent=27 // pred_check
          %p567 = pneg %p180
        $region66: #{tpu_custom_call.1} parent=27 // pred_check_branch
          %569 = sbr.rel (%p567) target = $region68
        $region67: #{tpu_custom_call.1} parent=27 // pred_region
          %p570 = scmp.lt.s32.totalorder %s28, 0
          %s571 = scalar_select %p570, %s28, 0
          %s572 = smul.addr %s571, 4
          %s573 = scalar_lea.vmem %s4, %s572
        $region68: #{tpu_custom_call.1} parent=27 // pred_fallthru
          _
      $region28: #{tpu_custom_call.1} parent=5 // pred_fallthru
        _
      %p574 = scmp.le.s32.totalorder 2, %s18
      // Predicated region
      $region69: #{tpu_custom_call.1} parent=5 // pred_check
        %p575 = pneg %p574
      $region70: #{tpu_custom_call.1} parent=5 // pred_check_branch
        %577 = sbr.rel (%p575) target = $region72
      $region71: #{tpu_custom_call.1} parent=5 // pred_region
        %s578 = ssub.s32 %s18, 2
      $region72: #{tpu_custom_call.1} parent=5 // pred_fallthru
        _
    $region6: #{tpu_custom_call.1} parent=1 // loop_footer
      %s22 = sadd.s32 1, %s18
    $region7: #{tpu_custom_call.1} parent=1 // loop_footer_branch
      %17 = sbr.rel target = $region3
    $region8: #{tpu_custom_call.1} parent=1 // loop_exit
      _
    %579 = vsyncpa [#allocation6], 1
    %s580 = scalar_lea.sflag [#allocation6], 1
    %581 = vsyncpa %s580, 1
    %582 = vsyncpa [#allocation9], 1
    %s583 = scalar_lea.sflag [#allocation9], 1
    %584 = vsyncpa %s583, 1
    %585 = vsyncpa [#allocation7], 1
    %s586 = scalar_lea.sflag [#allocation7], 1
    %587 = vsyncpa %s586, 1

</llo_original>
